<compile_context>
chip_gen: v7x
topology: tpu7x:2x2x1
jax: 0.10.0
libtpu: 0.0.40
codegen_flags: <defaults>
</compile_context>

<pallas_src>
import functools

import jax
import jax.numpy as jnp
from jax.experimental import pallas as pl
from jax.experimental.pallas import tpu as pltpu

# Logical (unpadded) dims of the PyTorch module.
D_IN, D_H1, D_H2, D_OUT = 300, 200, 100, 10
# Lane-padded dims (multiples of 128).
P_IN, P_H1, P_H2, P_OUT = 384, 256, 128, 128

TILE_B_MAX = 512  # rows per grid step (multiple of 8)


def _round_up(n, m):
    return ((n + m - 1) // m) * m


def ddml_forward_kernel(x_ref, w1_ref, b1_ref, w2_ref, b2_ref, w3_ref, b3_ref,
                        out_ref):
    # x tile and weights are bf16; all accumulation / elementwise math is f32.
    x = x_ref[...]                                                   # (TB, 384) bf16

    # fc1 + tanh
    h1 = jnp.dot(x, w1_ref[...], preferred_element_type=jnp.float32)  # f32
    h1 = jnp.tanh(h1 + b1_ref[...])

    # fc2 + tanh
    h2 = jnp.dot(h1.astype(jnp.bfloat16), w2_ref[...],
                 preferred_element_type=jnp.float32)
    h2 = jnp.tanh(h2 + b2_ref[...])

    # fc3 (no activation); padded output columns are exactly zero.
    y = jnp.dot(h2.astype(jnp.bfloat16), w3_ref[...],
                preferred_element_type=jnp.float32)
    out_ref[...] = (y + b3_ref[...]).astype(out_ref.dtype)


def _prepare_params(params):
    """Zero-pad weights/biases to lane-aligned shapes; weights -> bf16."""
    def pad_w(w, rin, cin):
        wp = jnp.zeros((rin, cin), jnp.float32).at[:w.shape[0], :w.shape[1]].set(w)
        return wp.astype(jnp.bfloat16)

    def pad_b(b, cin):
        return jnp.zeros((1, cin), jnp.float32).at[:, :b.shape[1]].set(b)

    return (pad_w(params["w1"], P_IN, P_H1), pad_b(params["b1"], P_H1),
            pad_w(params["w2"], P_H1, P_H2), pad_b(params["b2"], P_H2),
            pad_w(params["w3"], P_H2, P_OUT), pad_b(params["b3"], P_OUT))


@functools.partial(jax.jit, static_argnames=())
def ddml_forward(x, params):
    """x: (B, 300) float32.  params: dict with (in, out) weights and (1, out) biases."""
    B = x.shape[0]
    w1, b1, w2, b2, w3, b3 = _prepare_params(params)

    # Batch tiling: pad B up to a multiple of the row tile.
    tile_b = min(TILE_B_MAX, _round_up(B, 8))
    b_pad = _round_up(B, tile_b)
    num_tiles = b_pad // tile_b

    # Pad x: batch to b_pad rows, features to 384 lanes, cast to bf16 so the
    # streamed bytes from HBM are halved.
    x_p = jnp.zeros((b_pad, P_IN), jnp.bfloat16).at[:B, :D_IN].set(
        x.astype(jnp.bfloat16))

    const = lambda shape: pl.BlockSpec(shape, lambda i: (0, 0))

    out_padded = pl.pallas_call(
        ddml_forward_kernel,
        out_shape=jax.ShapeDtypeStruct((b_pad, P_OUT), jnp.float32),
        grid=(num_tiles,),
        in_specs=[
            pl.BlockSpec((tile_b, P_IN), lambda i: (i, 0)),   # x rows
            const((P_IN, P_H1)), const((1, P_H1)),            # fc1 (resident)
            const((P_H1, P_H2)), const((1, P_H2)),            # fc2 (resident)
            const((P_H2, P_OUT)), const((1, P_OUT)),          # fc3 (resident)
        ],
        out_specs=pl.BlockSpec((tile_b, P_OUT), lambda i: (i, 0)),
        compiler_params=pltpu.CompilerParams(
            dimension_semantics=("parallel",)),
    )(x_p, w1, b1, w2, b2, w3, b3)

    # Slice back to the logical (B, 10) output.
    return out_padded[:B, :D_OUT]


def init_params(key):
    """Deterministic init mimicking nn.Linear defaults (uniform +-1/sqrt(fan_in)).

    Stored transposed to (in, out) for the kernel / reference.
    """
    dims = [(D_IN, D_H1), (D_H1, D_H2), (D_H2, D_OUT)]
    params = {}
    keys = jax.random.split(key, 2 * len(dims))
    for i, (fan_in, fan_out) in enumerate(dims):
        bound = 1.0 / jnp.sqrt(fan_in)
        w = jax.random.uniform(keys[2 * i], (fan_in, fan_out),
                               minval=-bound, maxval=bound, dtype=jnp.float32)
        b = jax.random.uniform(keys[2 * i + 1], (1, fan_out),
                               minval=-bound, maxval=bound, dtype=jnp.float32)
        params[f"w{i + 1}"] = w
        params[f"b{i + 1}"] = b
    return params


def ddml_forward_ref(x, params):
    """Pure-JAX f32 reference for correctness check."""
    h = jnp.tanh(x @ params["w1"] + params["b1"])
    h = jnp.tanh(h @ params["w2"] + params["b2"])
    return h @ params["w3"] + params["b3"]


if __name__ == "__main__":
    key = jax.random.PRNGKey(0)
    pkey, xkey = jax.random.split(key)
    params = init_params(pkey)

    B = 8
    x = jax.random.normal(xkey, (B, D_IN), dtype=jnp.float32)

    y = ddml_forward(x, params)
    y = jax.block_until_ready(y)

    y_ref = ddml_forward_ref(x, params)
    assert y.shape == (B, D_OUT)
    # bf16 MXU operands loosen the tolerance vs the f32 reference.
    assert jnp.allclose(y, y_ref, atol=2e-2, rtol=2e-2), (
        float(jnp.max(jnp.abs(y - y_ref))))

    print("KERNEL_OK")
</pallas_src>

<mosaic_0001>
module attributes {stable_mosaic.version = 11 : i64} {
  func.func @ddml_forward_kernel(%arg0: i32, %arg1: memref<8x384xbf16, #tpu.memory_space<vmem>>, %arg2: memref<384x256xbf16, #tpu.memory_space<vmem>>, %arg3: memref<1x256xf32, #tpu.memory_space<vmem>>, %arg4: memref<256x128xbf16, #tpu.memory_space<vmem>>, %arg5: memref<1x128xf32, #tpu.memory_space<vmem>>, %arg6: memref<128x128xbf16, #tpu.memory_space<vmem>>, %arg7: memref<1x128xf32, #tpu.memory_space<vmem>>, %arg8: memref<8x128xf32, #tpu.memory_space<vmem>>) attributes {dimension_semantics = [#tpu.dimension_semantics<parallel>], iteration_bounds = array<i64: 1>, scalar_prefetch = 0 : i64, scratch_operands = 0 : i64, tpu.core_type = #tpu.core_type<tc>, window_params = [{transform_indices = @transform_0, window_bounds = array<i64: 8, 384>}, {pipeline_mode = #tpu.pipeline_mode<synchronous>, transform_indices = @transform_1, window_bounds = array<i64: 384, 256>}, {pipeline_mode = #tpu.pipeline_mode<synchronous>, transform_indices = @transform_2, window_bounds = array<i64: 1, 256>}, {pipeline_mode = #tpu.pipeline_mode<synchronous>, transform_indices = @transform_3, window_bounds = array<i64: 256, 128>}, {pipeline_mode = #tpu.pipeline_mode<synchronous>, transform_indices = @transform_4, window_bounds = array<i64: 1, 128>}, {pipeline_mode = #tpu.pipeline_mode<synchronous>, transform_indices = @transform_5, window_bounds = array<i64: 128, 128>}, {pipeline_mode = #tpu.pipeline_mode<synchronous>, transform_indices = @transform_6, window_bounds = array<i64: 1, 128>}, {transform_indices = @transform_7, window_bounds = array<i64: 8, 128>}]} {
    %c0 = arith.constant 0 : index
    %c0_0 = arith.constant 0 : index
    %0 = vector.load %arg1[%c0, %c0_0] : memref<8x384xbf16, #tpu.memory_space<vmem>>, vector<8x384xbf16>
    %c0_1 = arith.constant 0 : index
    %c0_2 = arith.constant 0 : index
    %1 = vector.load %arg2[%c0_1, %c0_2] : memref<384x256xbf16, #tpu.memory_space<vmem>>, vector<384x256xbf16>
    %cst = arith.constant dense<0.000000e+00> : vector<8x256xf32>
    %2 = tpu.matmul %0, %1, %cst {dimension_numbers = #tpu.dot_dimension_numbers<[1], [0], [0], [1], [0, 0, 1, 1], [], []>} : vector<8x384xbf16>, vector<384x256xbf16>, vector<8x256xf32> -> vector<8x256xf32>
    %c0_3 = arith.constant 0 : index
    %c0_4 = arith.constant 0 : index
    %3 = vector.load %arg3[%c0_3, %c0_4] : memref<1x256xf32, #tpu.memory_space<vmem>>, vector<1x256xf32>
    %4 = vector.broadcast %3 : vector<1x256xf32> to vector<8x256xf32>
    %5 = arith.addf %2, %4 : vector<8x256xf32>
    %6 = math.tanh %5 : vector<8x256xf32>
    %7 = arith.truncf %6 : vector<8x256xf32> to vector<8x256xbf16>
    %c0_5 = arith.constant 0 : index
    %c0_6 = arith.constant 0 : index
    %8 = vector.load %arg4[%c0_5, %c0_6] : memref<256x128xbf16, #tpu.memory_space<vmem>>, vector<256x128xbf16>
    %cst_7 = arith.constant dense<0.000000e+00> : vector<8x128xf32>
    %9 = tpu.matmul %7, %8, %cst_7 {dimension_numbers = #tpu.dot_dimension_numbers<[1], [0], [0], [1], [0, 0, 1, 1], [], []>} : vector<8x256xbf16>, vector<256x128xbf16>, vector<8x128xf32> -> vector<8x128xf32>
    %c0_8 = arith.constant 0 : index
    %c0_9 = arith.constant 0 : index
    %10 = vector.load %arg5[%c0_8, %c0_9] : memref<1x128xf32, #tpu.memory_space<vmem>>, vector<1x128xf32>
    %11 = vector.broadcast %10 : vector<1x128xf32> to vector<8x128xf32>
    %12 = arith.addf %9, %11 : vector<8x128xf32>
    %13 = math.tanh %12 : vector<8x128xf32>
    %14 = arith.truncf %13 : vector<8x128xf32> to vector<8x128xbf16>
    %c0_10 = arith.constant 0 : index
    %c0_11 = arith.constant 0 : index
    %15 = vector.load %arg6[%c0_10, %c0_11] : memref<128x128xbf16, #tpu.memory_space<vmem>>, vector<128x128xbf16>
    %cst_12 = arith.constant dense<0.000000e+00> : vector<8x128xf32>
    %16 = tpu.matmul %14, %15, %cst_12 {dimension_numbers = #tpu.dot_dimension_numbers<[1], [0], [0], [1], [0, 0, 1, 1], [], []>} : vector<8x128xbf16>, vector<128x128xbf16>, vector<8x128xf32> -> vector<8x128xf32>
    %c0_13 = arith.constant 0 : index
    %c0_14 = arith.constant 0 : index
    %17 = vector.load %arg7[%c0_13, %c0_14] : memref<1x128xf32, #tpu.memory_space<vmem>>, vector<1x128xf32>
    %18 = vector.broadcast %17 : vector<1x128xf32> to vector<8x128xf32>
    %19 = arith.addf %16, %18 : vector<8x128xf32>
    %c0_15 = arith.constant 0 : index
    %c0_16 = arith.constant 0 : index
    %20 = vector.load %arg8[%c0_15, %c0_16] : memref<8x128xf32, #tpu.memory_space<vmem>>, vector<8x128xf32>
    tpu.vector_store %arg8[%c0_15, %c0_16], %19 {strides = array<i32>} : memref<8x128xf32, #tpu.memory_space<vmem>>, vector<8x128xf32>,
    return
  }
  func.func @transform_0(%arg0: i32) -> (i32, i32) {
    %c0_i32 = arith.constant 0 : i32
    %c0_i32_0 = arith.constant 0 : i32
    return %arg0, %c0_i32 : i32, i32
  }
  func.func @transform_1(%arg0: i32) -> (i32, i32) {
    %c0_i32 = arith.constant 0 : i32
    %c0_i32_0 = arith.constant 0 : i32
    %c0_i32_1 = arith.constant 0 : i32
    return %c0_i32, %c0_i32_0 : i32, i32
  }
  func.func @transform_2(%arg0: i32) -> (i32, i32) {
    %c0_i32 = arith.constant 0 : i32
    %c0_i32_0 = arith.constant 0 : i32
    %c0_i32_1 = arith.constant 0 : i32
    return %c0_i32, %c0_i32_0 : i32, i32
  }
  func.func @transform_3(%arg0: i32) -> (i32, i32) {
    %c0_i32 = arith.constant 0 : i32
    %c0_i32_0 = arith.constant 0 : i32
    %c0_i32_1 = arith.constant 0 : i32
    return %c0_i32, %c0_i32_0 : i32, i32
  }
  func.func @transform_4(%arg0: i32) -> (i32, i32) {
    %c0_i32 = arith.constant 0 : i32
    %c0_i32_0 = arith.constant 0 : i32
    %c0_i32_1 = arith.constant 0 : i32
    return %c0_i32, %c0_i32_0 : i32, i32
  }
  func.func @transform_5(%arg0: i32) -> (i32, i32) {
    %c0_i32 = arith.constant 0 : i32
    %c0_i32_0 = arith.constant 0 : i32
    %c0_i32_1 = arith.constant 0 : i32
    return %c0_i32, %c0_i32_0 : i32, i32
  }
  func.func @transform_6(%arg0: i32) -> (i32, i32) {
    %c0_i32 = arith.constant 0 : i32
    %c0_i32_0 = arith.constant 0 : i32
    %c0_i32_1 = arith.constant 0 : i32
    return %c0_i32, %c0_i32_0 : i32, i32
  }
  func.func @transform_7(%arg0: i32) -> (i32, i32) {
    %c0_i32 = arith.constant 0 : i32
    %c0_i32_0 = arith.constant 0 : i32
    return %arg0, %c0_i32 : i32, i32
  }
}

</mosaic_0001>

<llo_original>
// kernel: ddml_forward.1
$region0: #{ddml_forward.1}
  #allocation0 [shape = 'u32[]', space=smem, size = 0x4, offset = 0x4, fixed_abs, tag = 'smem constant byte address 0x4 - core index']
  #allocation1 [shape = 'u32[144,128]{1,0:T(1,128)}', space=vmem, size = 0x12000, scoped, tag = 'internal scratch']
  %s0 = inlined_call_operand.vmem [shape: bf16[8,384], index: 0, kind: input, shape index: {}]
  %s1 = inlined_call_operand.vmem [shape: bf16[384,256], index: 1, kind: input, shape index: {}]
  %s2 = inlined_call_operand.vmem [shape: f32[1,256], index: 2, kind: input, shape index: {}]
  %s3 = inlined_call_operand.vmem [shape: bf16[256,128], index: 3, kind: input, shape index: {}]
  %s4 = inlined_call_operand.vmem [shape: f32[1,128], index: 4, kind: input, shape index: {}]
  %s5 = inlined_call_operand.vmem [shape: bf16[128,128], index: 5, kind: input, shape index: {}]
  %s6 = inlined_call_operand.vmem [shape: f32[1,128], index: 6, kind: input, shape index: {}]
  %s7 = inlined_call_operand.hbm [shape: f32[8,128], index: 7, kind: output, shape index: {}]
  %s8 = sld [smem:[#allocation0]]
  $region38: #{ddml_forward.1} parent=0
    _
  %s10 = ssub.s32 1, %s8
  %s11 = scalar_select 0, %s10, %s8
  $region1: #{ddml_forward.1} parent=0
    #allocation2 [shape = 'u8[4096]{0}', space=vmem, size = 0x1000, scoped, tag = 'output window, operand 0, single buffered']
    #allocation3 [shape = 's32[1]{0}', space=sflag, size = 0x4, scoped, tag = 'scoped memory for ddml_forward.1']
    %12 = vsyncpa [#allocation3], 0
    // Predicated region
    $region2: #{ddml_forward.1} parent=1 // pred_check
      _
    $region3: #{ddml_forward.1} parent=1 // pred_check_branch
      %14 = sbr.rel (0) target = $region5
    $region4: #{ddml_forward.1} parent=1 // pred_region
      _
    $region5: #{ddml_forward.1} parent=1 // pred_fallthru
      _
    // Predicated region
    $region6: #{ddml_forward.1} parent=1 // pred_check
      _
    $region7: #{ddml_forward.1} parent=1 // pred_check_branch
      %16 = sbr.rel (0) target = $region9
    $region8: #{ddml_forward.1} parent=1 // pred_region
      _
    $region9: #{ddml_forward.1} parent=1 // pred_fallthru
      _
    // Predicated region
    $region10: #{ddml_forward.1} parent=1 // pred_check
      _
    $region11: #{ddml_forward.1} parent=1 // pred_check_branch
      %18 = sbr.rel (0) target = $region13
    $region12: #{ddml_forward.1} parent=1 // pred_region
      _
    $region13: #{ddml_forward.1} parent=1 // pred_fallthru
      _
    // Predicated region
    $region14: #{ddml_forward.1} parent=1 // pred_check
      _
    $region15: #{ddml_forward.1} parent=1 // pred_check_branch
      %20 = sbr.rel (0) target = $region17
    $region16: #{ddml_forward.1} parent=1 // pred_region
      _
    $region17: #{ddml_forward.1} parent=1 // pred_fallthru
      _
    // Predicated region
    $region18: #{ddml_forward.1} parent=1 // pred_check
      _
    $region19: #{ddml_forward.1} parent=1 // pred_check_branch
      %22 = sbr.rel (0) target = $region21
    $region20: #{ddml_forward.1} parent=1 // pred_region
      _
    $region21: #{ddml_forward.1} parent=1 // pred_fallthru
      _
    // Predicated region
    $region22: #{ddml_forward.1} parent=1 // pred_check
      _
    $region23: #{ddml_forward.1} parent=1 // pred_check_branch
      %24 = sbr.rel (0) target = $region25
    $region24: #{ddml_forward.1} parent=1 // pred_region
      _
    $region25: #{ddml_forward.1} parent=1 // pred_fallthru
      _
    // Predicated region
    $region26: #{ddml_forward.1} parent=1 // pred_check
      _
    $region27: #{ddml_forward.1} parent=1 // pred_check_branch
      %26 = sbr.rel (0) target = $region29
    $region28: #{ddml_forward.1} parent=1 // pred_region
      _
    $region29: #{ddml_forward.1} parent=1 // pred_fallthru
      _
    %v28 = vld [vmem:[%s0] sm:$0xff]
    %v29 = vld [vmem:[%s0 + $0x8] sm:$0xf]
    %v30 = vld [vmem:[%s1] sm:$0xff]
    %v31 = vld [vmem:[%s1 + $0x8] sm:$0xff]
    %v32 = vld [vmem:[%s1 + $0x10] sm:$0xff]
    %v33 = vld [vmem:[%s1 + $0x18] sm:$0xff]
    %v34 = vld [vmem:[%s1 + $0x20] sm:$0xff]
    %v35 = vld [vmem:[%s1 + $0x28] sm:$0xff]
    %v36 = vld [vmem:[%s1 + $0x30] sm:$0xff]
    %v37 = vld [vmem:[%s1 + $0x38] sm:$0xff]
    %v38 = vld [vmem:[%s1 + $0x40] sm:$0xff]
    %v39 = vld [vmem:[%s1 + $0x48] sm:$0xff]
    %v40 = vld [vmem:[%s1 + $0x50] sm:$0xff]
    %v41 = vld [vmem:[%s1 + $0x58] sm:$0xff]
    %v42 = vld [vmem:[%s1 + $0x60] sm:$0xff]
    %v43 = vld [vmem:[%s1 + $0x68] sm:$0xff]
    %v44 = vld [vmem:[%s1 + $0x70] sm:$0xff]
    %v45 = vld [vmem:[%s1 + $0x78] sm:$0xff]
    %v46 = vld [vmem:[%s1 + $0x80] sm:$0xff]
    %v47 = vld [vmem:[%s1 + $0x88] sm:$0xff]
    %v48 = vld [vmem:[%s1 + $0x90] sm:$0xff]
    %v49 = vld [vmem:[%s1 + $0x98] sm:$0xff]
    %v50 = vld [vmem:[%s1 + $0xa0] sm:$0xff]
    %v51 = vld [vmem:[%s1 + $0xa8] sm:$0xff]
    %v52 = vld [vmem:[%s1 + $0xb0] sm:$0xff]
    %v53 = vld [vmem:[%s1 + $0xb8] sm:$0xff]
    %v54 = vld [vmem:[%s1 + $0xc0] sm:$0xff]
    %v55 = vld [vmem:[%s1 + $0xc8] sm:$0xff]
    %v56 = vld [vmem:[%s1 + $0xd0] sm:$0xff]
    %v57 = vld [vmem:[%s1 + $0xd8] sm:$0xff]
    %v58 = vld [vmem:[%s1 + $0xe0] sm:$0xff]
    %v59 = vld [vmem:[%s1 + $0xe8] sm:$0xff]
    %v60 = vld [vmem:[%s1 + $0xf0] sm:$0xff]
    %v61 = vld [vmem:[%s1 + $0xf8] sm:$0xff]
    %v62 = vld [vmem:[%s1 + $0x100] sm:$0xff]
    %v63 = vld [vmem:[%s1 + $0x108] sm:$0xff]
    %v64 = vld [vmem:[%s1 + $0x110] sm:$0xff]
    %v65 = vld [vmem:[%s1 + $0x118] sm:$0xff]
    %v66 = vld [vmem:[%s1 + $0x120] sm:$0xff]
    %v67 = vld [vmem:[%s1 + $0x128] sm:$0xff]
    %v68 = vld [vmem:[%s1 + $0x130] sm:$0xff]
    %v69 = vld [vmem:[%s1 + $0x138] sm:$0xff]
    %v70 = vld [vmem:[%s1 + $0x140] sm:$0xff]
    %v71 = vld [vmem:[%s1 + $0x148] sm:$0xff]
    %v72 = vld [vmem:[%s1 + $0x150] sm:$0xff]
    %v73 = vld [vmem:[%s1 + $0x158] sm:$0xff]
    %v74 = vld [vmem:[%s1 + $0x160] sm:$0xff]
    %v75 = vld [vmem:[%s1 + $0x168] sm:$0xff]
    %v76 = vld [vmem:[%s1 + $0x170] sm:$0xff]
    %v77 = vld [vmem:[%s1 + $0x178] sm:$0xff]
    %v78 = vld [vmem:[%s2] sm:$0x3]
    %v80 = vlaneseq
    %v81 = vshrl.u32 %v80, 7
    %v82 = vsub.s32 0, %v81
    %v83 = vrot.slane %v78, %v82
    %v84 = vlaneseq
    %v85 = vshrl.u32 %v84, 7
    %v86 = vsub.s32 1, %v85
    %v87 = vrot.slane %v78, %v86
    %v92 = vunpack.c.l.b16 %v28
    %v93 = vunpack.c.h.b16 %v28
    %v94 = vunpack.c.l.b16 %v29
    %v95 = vpack.c.b16 %v92, %v92
    %v96 = vpack.c.b16 %v93, %v93
    %v97 = vpack.c.b16 %v94, %v94
    %v149 = vunpack.c.l.b16 %v30
    %v150 = vunpack.c.h.b16 %v30
    %v151 = vunpack.c.l.b16 %v31
    %v152 = vunpack.c.h.b16 %v31
    %v153 = vunpack.c.l.b16 %v32
    %v154 = vunpack.c.h.b16 %v32
    %v155 = vunpack.c.l.b16 %v33
    %v156 = vunpack.c.h.b16 %v33
    %v157 = vunpack.c.l.b16 %v34
    %v158 = vunpack.c.h.b16 %v34
    %v159 = vunpack.c.l.b16 %v35
    %v160 = vunpack.c.h.b16 %v35
    %v161 = vunpack.c.l.b16 %v36
    %v162 = vunpack.c.h.b16 %v36
    %v163 = vunpack.c.l.b16 %v37
    %v164 = vunpack.c.h.b16 %v37
    %v165 = vunpack.c.l.b16 %v38
    %v166 = vunpack.c.h.b16 %v38
    %v167 = vunpack.c.l.b16 %v39
    %v168 = vunpack.c.h.b16 %v39
    %v169 = vunpack.c.l.b16 %v40
    %v170 = vunpack.c.h.b16 %v40
    %v171 = vunpack.c.l.b16 %v41
    %v172 = vunpack.c.h.b16 %v41
    %v173 = vunpack.c.l.b16 %v42
    %v174 = vunpack.c.h.b16 %v42
    %v175 = vunpack.c.l.b16 %v43
    %v176 = vunpack.c.h.b16 %v43
    %v177 = vunpack.c.l.b16 %v44
    %v178 = vunpack.c.h.b16 %v44
    %v179 = vunpack.c.l.b16 %v45
    %v180 = vunpack.c.h.b16 %v45
    %v181 = vunpack.c.l.b16 %v46
    %v182 = vunpack.c.h.b16 %v46
    %v183 = vunpack.c.l.b16 %v47
    %v184 = vunpack.c.h.b16 %v47
    %v185 = vunpack.c.l.b16 %v48
    %v186 = vunpack.c.h.b16 %v48
    %v187 = vunpack.c.l.b16 %v49
    %v188 = vunpack.c.h.b16 %v49
    %v189 = vunpack.c.l.b16 %v50
    %v190 = vunpack.c.h.b16 %v50
    %v191 = vunpack.c.l.b16 %v51
    %v192 = vunpack.c.h.b16 %v51
    %v193 = vunpack.c.l.b16 %v52
    %v194 = vunpack.c.h.b16 %v52
    %v195 = vunpack.c.l.b16 %v53
    %v196 = vunpack.c.h.b16 %v53
    %v197 = vunpack.c.l.b16 %v54
    %v198 = vunpack.c.h.b16 %v54
    %v199 = vunpack.c.l.b16 %v55
    %v200 = vunpack.c.h.b16 %v55
    %v201 = vunpack.c.l.b16 %v56
    %v202 = vunpack.c.h.b16 %v56
    %v203 = vunpack.c.l.b16 %v57
    %v204 = vunpack.c.h.b16 %v57
    %v205 = vunpack.c.l.b16 %v58
    %v206 = vunpack.c.h.b16 %v58
    %v207 = vunpack.c.l.b16 %v59
    %v208 = vunpack.c.h.b16 %v59
    %v209 = vunpack.c.l.b16 %v60
    %v210 = vunpack.c.h.b16 %v60
    %v211 = vunpack.c.l.b16 %v61
    %v212 = vunpack.c.h.b16 %v61
    %v213 = vunpack.c.l.b16 %v62
    %v214 = vunpack.c.h.b16 %v62
    %v215 = vunpack.c.l.b16 %v63
    %v216 = vunpack.c.h.b16 %v63
    %v217 = vunpack.c.l.b16 %v64
    %v218 = vunpack.c.h.b16 %v64
    %v219 = vunpack.c.l.b16 %v65
    %v220 = vunpack.c.h.b16 %v65
    %v221 = vunpack.c.l.b16 %v66
    %v222 = vunpack.c.h.b16 %v66
    %v223 = vunpack.c.l.b16 %v67
    %v224 = vunpack.c.h.b16 %v67
    %v225 = vunpack.c.l.b16 %v68
    %v226 = vunpack.c.h.b16 %v68
    %v227 = vunpack.c.l.b16 %v69
    %v228 = vunpack.c.h.b16 %v69
    %v229 = vunpack.c.l.b16 %v70
    %v230 = vunpack.c.h.b16 %v70
    %v231 = vunpack.c.l.b16 %v71
    %v232 = vunpack.c.h.b16 %v71
    %v233 = vunpack.c.l.b16 %v72
    %v234 = vunpack.c.h.b16 %v72
    %v235 = vunpack.c.l.b16 %v73
    %v236 = vunpack.c.h.b16 %v73
    %v237 = vunpack.c.l.b16 %v74
    %v238 = vunpack.c.h.b16 %v74
    %v239 = vunpack.c.l.b16 %v75
    %v240 = vunpack.c.h.b16 %v75
    %v241 = vunpack.c.l.b16 %v76
    %v242 = vunpack.c.h.b16 %v76
    %v243 = vunpack.c.l.b16 %v77
    %v244 = vunpack.c.h.b16 %v77
    %v245 = vpack.c.b16 %v151, %v149
    %v246 = vpack.c.b16 %v152, %v150
    %v247 = vpack.c.b16 %v155, %v153
    %v248 = vpack.c.b16 %v156, %v154
    %v249 = vpack.c.b16 %v159, %v157
    %v250 = vpack.c.b16 %v160, %v158
    %v251 = vpack.c.b16 %v163, %v161
    %v252 = vpack.c.b16 %v164, %v162
    %v253 = vpack.c.b16 %v167, %v165
    %v254 = vpack.c.b16 %v168, %v166
    %v255 = vpack.c.b16 %v171, %v169
    %v256 = vpack.c.b16 %v172, %v170
    %v257 = vpack.c.b16 %v175, %v173
    %v258 = vpack.c.b16 %v176, %v174
    %v259 = vpack.c.b16 %v179, %v177
    %v260 = vpack.c.b16 %v180, %v178
    %v261 = vpack.c.b16 %v183, %v181
    %v262 = vpack.c.b16 %v184, %v182
    %v263 = vpack.c.b16 %v187, %v185
    %v264 = vpack.c.b16 %v188, %v186
    %v265 = vpack.c.b16 %v191, %v189
    %v266 = vpack.c.b16 %v192, %v190
    %v267 = vpack.c.b16 %v195, %v193
    %v268 = vpack.c.b16 %v196, %v194
    %v269 = vpack.c.b16 %v199, %v197
    %v270 = vpack.c.b16 %v200, %v198
    %v271 = vpack.c.b16 %v203, %v201
    %v272 = vpack.c.b16 %v204, %v202
    %v273 = vpack.c.b16 %v207, %v205
    %v274 = vpack.c.b16 %v208, %v206
    %v275 = vpack.c.b16 %v211, %v209
    %v276 = vpack.c.b16 %v212, %v210
    %v277 = vpack.c.b16 %v215, %v213
    %v278 = vpack.c.b16 %v216, %v214
    %v279 = vpack.c.b16 %v219, %v217
    %v280 = vpack.c.b16 %v220, %v218
    %v281 = vpack.c.b16 %v223, %v221
    %v282 = vpack.c.b16 %v224, %v222
    %v283 = vpack.c.b16 %v227, %v225
    %v284 = vpack.c.b16 %v228, %v226
    %v285 = vpack.c.b16 %v231, %v229
    %v286 = vpack.c.b16 %v232, %v230
    %v287 = vpack.c.b16 %v235, %v233
    %v288 = vpack.c.b16 %v236, %v234
    %v289 = vpack.c.b16 %v239, %v237
    %v290 = vpack.c.b16 %v240, %v238
    %v291 = vpack.c.b16 %v243, %v241
    %v292 = vpack.c.b16 %v244, %v242
    %341 = vmatprep.subr.bf16.mxu0 %v246
    %342 = vmatpush1.bf16.msra.mxu0 %v245
    %343 = vmatprep.subr.bf16.mxu0 %v248
    %344 = vmatpush1.bf16.msra.mxu0 %v247
    %345 = vmatprep.subr.bf16.mxu0 %v250
    %346 = vmatpush1.bf16.msra.mxu0 %v249
    %347 = vmatprep.subr.bf16.mxu0 %v252
    %348 = vmatpush1.bf16.msra.mxu0 %v251
    %349 = vmatprep.subr.bf16.mxu0 %v254
    %350 = vmatpush1.bf16.msra.mxu0 %v253
    %351 = vmatprep.subr.bf16.mxu0 %v256
    %352 = vmatpush1.bf16.msra.mxu0 %v255
    %353 = vmatprep.subr.bf16.mxu0 %v258
    %354 = vmatpush1.bf16.msra.mxu0 %v257
    %355 = vmatprep.subr.bf16.mxu0 %v260
    %356 = vmatpush1.bf16.msra.mxu0 %v259
    %357 = vmatprep.subr.bf16.mxu0 %v262
    %358 = vmatpush1.bf16.msra.mxu0 %v261
    %359 = vmatprep.subr.bf16.mxu0 %v264
    %360 = vmatpush1.bf16.msra.mxu0 %v263
    %361 = vmatprep.subr.bf16.mxu0 %v266
    %362 = vmatpush1.bf16.msra.mxu0 %v265
    %363 = vmatprep.subr.bf16.mxu0 %v268
    %364 = vmatpush1.bf16.msra.mxu0 %v267
    %365 = vmatprep.subr.bf16.mxu0 %v270
    %366 = vmatpush1.bf16.msra.mxu0 %v269
    %367 = vmatprep.subr.bf16.mxu0 %v272
    %368 = vmatpush1.bf16.msra.mxu0 %v271
    %369 = vmatprep.subr.bf16.mxu0 %v274
    %370 = vmatpush1.bf16.msra.mxu0 %v273
    %371 = vmatprep.subr.bf16.mxu0 %v276
    %372 = vmatpush1.bf16.msra.mxu0 %v275
    %373 = vmatprep.mubr.bf16.mxu0 %v96
    %374 = vmatmul.mubr.bf16.gmra.mrb[0].mxu0 %v95
    %v375 = vpop.f32.mrb[0].mxu0
    %v376 = vadd.f32 %v83, %v375
    %v377 = vpop.f32.mrb[0].mxu0
    %v378 = vadd.f32 %v87, %v377
    %v379 = vpop.f32.mrb[0].mxu0
    %v380 = vpop.f32.mrb[0].mxu0
    %381 = vdwg.mxu0
    %382 = vmatprep.subr.bf16.mxu0 %v278
    %383 = vmatpush1.bf16.msra.mxu0 %v277
    %384 = vmatprep.subr.bf16.mxu0 %v280
    %385 = vmatpush1.bf16.msra.mxu0 %v279
    %386 = vmatprep.subr.bf16.mxu0 %v282
    %387 = vmatpush1.bf16.msra.mxu0 %v281
    %388 = vmatprep.subr.bf16.mxu0 %v284
    %389 = vmatpush1.bf16.msra.mxu0 %v283
    %390 = vmatprep.subr.bf16.mxu0 %v286
    %391 = vmatpush1.bf16.msra.mxu0 %v285
    %392 = vmatprep.subr.bf16.mxu0 %v288
    %393 = vmatpush1.bf16.msra.mxu0 %v287
    %394 = vmatprep.subr.bf16.mxu0 %v290
    %395 = vmatpush1.bf16.msra.mxu0 %v289
    %396 = vmatprep.subr.bf16.mxu0 %v292
    %397 = vmatpush1.bf16.msra.mxu0 %v291
    %398 = vmatprep.subr.bf16.mxu0 0
    %399 = vmatpush1.bf16.msra.mxu0 0
    %400 = vmatprep.subr.bf16.mxu0 0
    %401 = vmatpush1.bf16.msra.mxu0 0
    %402 = vmatprep.subr.bf16.mxu0 0
    %403 = vmatpush1.bf16.msra.mxu0 0
    %404 = vmatprep.subr.bf16.mxu0 0
    %405 = vmatpush1.bf16.msra.mxu0 0
    %406 = vmatprep.subr.bf16.mxu0 0
    %407 = vmatpush1.bf16.msra.mxu0 0
    %408 = vmatprep.subr.bf16.mxu0 0
    %409 = vmatpush1.bf16.msra.mxu0 0
    %410 = vmatprep.subr.bf16.mxu0 0
    %411 = vmatpush1.bf16.msra.mxu0 0
    %412 = vmatprep.subr.bf16.mxu0 0
    %413 = vmatpush1.bf16.msra.mxu0 0
    %414 = vmatprep.mubr.bf16.mxu0 0
    %415 = vmatmul.mubr.bf16.gmra.mrb[0].mxu0 %v97
    %v416 = vpop.f32.mrb[0].mxu0
    %v417 = vadd.f32 %v376, %v416
    %v418 = vpop.f32.mrb[0].mxu0
    %v419 = vadd.f32 %v378, %v418
    %v420 = vpop.f32.mrb[0].mxu0
    %v421 = vpop.f32.mrb[0].mxu0
    %422 = vdwg.mxu0
    %v423 = vtanh.pop %v417
    %v424 = vtanh.pop %v419
    %v425 = vpack.c.bf16 %v423, %v423
    %v426 = vpack.c.bf16 %v424, %v424
    %v427 = vld [vmem:[%s3] sm:$0xf]
    %v428 = vld [vmem:[%s3 + $0x4] sm:$0xf]
    %v429 = vld [vmem:[%s3 + $0x8] sm:$0xf]
    %v430 = vld [vmem:[%s3 + $0xc] sm:$0xf]
    %v431 = vld [vmem:[%s3 + $0x10] sm:$0xf]
    %v432 = vld [vmem:[%s3 + $0x14] sm:$0xf]
    %v433 = vld [vmem:[%s3 + $0x18] sm:$0xf]
    %v434 = vld [vmem:[%s3 + $0x1c] sm:$0xf]
    %v435 = vld [vmem:[%s3 + $0x20] sm:$0xf]
    %v436 = vld [vmem:[%s3 + $0x24] sm:$0xf]
    %v437 = vld [vmem:[%s3 + $0x28] sm:$0xf]
    %v438 = vld [vmem:[%s3 + $0x2c] sm:$0xf]
    %v439 = vld [vmem:[%s3 + $0x30] sm:$0xf]
    %v440 = vld [vmem:[%s3 + $0x34] sm:$0xf]
    %v441 = vld [vmem:[%s3 + $0x38] sm:$0xf]
    %v442 = vld [vmem:[%s3 + $0x3c] sm:$0xf]
    %v443 = vld [vmem:[%s3 + $0x40] sm:$0xf]
    %v444 = vld [vmem:[%s3 + $0x44] sm:$0xf]
    %v445 = vld [vmem:[%s3 + $0x48] sm:$0xf]
    %v446 = vld [vmem:[%s3 + $0x4c] sm:$0xf]
    %v447 = vld [vmem:[%s3 + $0x50] sm:$0xf]
    %v448 = vld [vmem:[%s3 + $0x54] sm:$0xf]
    %v449 = vld [vmem:[%s3 + $0x58] sm:$0xf]
    %v450 = vld [vmem:[%s3 + $0x5c] sm:$0xf]
    %v451 = vld [vmem:[%s3 + $0x60] sm:$0xf]
    %v452 = vld [vmem:[%s3 + $0x64] sm:$0xf]
    %v453 = vld [vmem:[%s3 + $0x68] sm:$0xf]
    %v454 = vld [vmem:[%s3 + $0x6c] sm:$0xf]
    %v455 = vld [vmem:[%s3 + $0x70] sm:$0xf]
    %v456 = vld [vmem:[%s3 + $0x74] sm:$0xf]
    %v457 = vld [vmem:[%s3 + $0x78] sm:$0xf]
    %v458 = vld [vmem:[%s3 + $0x7c] sm:$0xf]
    %v459 = vld [vmem:[%s4] sm:$0x1]
    %v461 = vlaneseq
    %v462 = vshrl.u32 %v461, 7
    %v463 = vsub.s32 0, %v462
    %v464 = vrot.slane %v459, %v463
    %v498 = vunpack.c.l.b16 %v427
    %v499 = vunpack.c.l.b16 %v428
    %v500 = vunpack.c.l.b16 %v429
    %v501 = vunpack.c.l.b16 %v430
    %v502 = vunpack.c.l.b16 %v431
    %v503 = vunpack.c.l.b16 %v432
    %v504 = vunpack.c.l.b16 %v433
    %v505 = vunpack.c.l.b16 %v434
    %v506 = vunpack.c.l.b16 %v435
    %v507 = vunpack.c.l.b16 %v436
    %v508 = vunpack.c.l.b16 %v437
    %v509 = vunpack.c.l.b16 %v438
    %v510 = vunpack.c.l.b16 %v439
    %v511 = vunpack.c.l.b16 %v440
    %v512 = vunpack.c.l.b16 %v441
    %v513 = vunpack.c.l.b16 %v442
    %v514 = vunpack.c.l.b16 %v443
    %v515 = vunpack.c.l.b16 %v444
    %v516 = vunpack.c.l.b16 %v445
    %v517 = vunpack.c.l.b16 %v446
    %v518 = vunpack.c.l.b16 %v447
    %v519 = vunpack.c.l.b16 %v448
    %v520 = vunpack.c.l.b16 %v449
    %v521 = vunpack.c.l.b16 %v450
    %v522 = vunpack.c.l.b16 %v451
    %v523 = vunpack.c.l.b16 %v452
    %v524 = vunpack.c.l.b16 %v453
    %v525 = vunpack.c.l.b16 %v454
    %v526 = vunpack.c.l.b16 %v455
    %v527 = vunpack.c.l.b16 %v456
    %v528 = vunpack.c.l.b16 %v457
    %v529 = vunpack.c.l.b16 %v458
    %v530 = vpack.c.b16 %v499, %v498
    %v531 = vpack.c.b16 %v501, %v500
    %v532 = vpack.c.b16 %v503, %v502
    %v533 = vpack.c.b16 %v505, %v504
    %v534 = vpack.c.b16 %v507, %v506
    %v535 = vpack.c.b16 %v509, %v508
    %v536 = vpack.c.b16 %v511, %v510
    %v537 = vpack.c.b16 %v513, %v512
    %v538 = vpack.c.b16 %v515, %v514
    %v539 = vpack.c.b16 %v517, %v516
    %v540 = vpack.c.b16 %v519, %v518
    %v541 = vpack.c.b16 %v521, %v520
    %v542 = vpack.c.b16 %v523, %v522
    %v543 = vpack.c.b16 %v525, %v524
    %v544 = vpack.c.b16 %v527, %v526
    %v545 = vpack.c.b16 %v529, %v528
    %562 = vmatprep.subr.bf16.mxu0 0
    %563 = vmatpush1.bf16.msra.mxu0 %v530
    %564 = vmatprep.subr.bf16.mxu0 0
    %565 = vmatpush1.bf16.msra.mxu0 %v531
    %566 = vmatprep.subr.bf16.mxu0 0
    %567 = vmatpush1.bf16.msra.mxu0 %v532
    %568 = vmatprep.subr.bf16.mxu0 0
    %569 = vmatpush1.bf16.msra.mxu0 %v533
    %570 = vmatprep.subr.bf16.mxu0 0
    %571 = vmatpush1.bf16.msra.mxu0 %v534
    %572 = vmatprep.subr.bf16.mxu0 0
    %573 = vmatpush1.bf16.msra.mxu0 %v535
    %574 = vmatprep.subr.bf16.mxu0 0
    %575 = vmatpush1.bf16.msra.mxu0 %v536
    %576 = vmatprep.subr.bf16.mxu0 0
    %577 = vmatpush1.bf16.msra.mxu0 %v537
    %578 = vmatprep.subr.bf16.mxu0 0
    %579 = vmatpush1.bf16.msra.mxu0 %v538
    %580 = vmatprep.subr.bf16.mxu0 0
    %581 = vmatpush1.bf16.msra.mxu0 %v539
    %582 = vmatprep.subr.bf16.mxu0 0
    %583 = vmatpush1.bf16.msra.mxu0 %v540
    %584 = vmatprep.subr.bf16.mxu0 0
    %585 = vmatpush1.bf16.msra.mxu0 %v541
    %586 = vmatprep.subr.bf16.mxu0 0
    %587 = vmatpush1.bf16.msra.mxu0 %v542
    %588 = vmatprep.subr.bf16.mxu0 0
    %589 = vmatpush1.bf16.msra.mxu0 %v543
    %590 = vmatprep.subr.bf16.mxu0 0
    %591 = vmatpush1.bf16.msra.mxu0 %v544
    %592 = vmatprep.subr.bf16.mxu0 0
    %593 = vmatpush1.bf16.msra.mxu0 %v545
    %594 = vmatprep.mubr.bf16.mxu0 %v426
    %595 = vmatmul.mubr.bf16.gmra.mrb[0].mxu0 %v425
    %v596 = vpop.f32.mrb[0].mxu0
    %v597 = vadd.f32 %v464, %v596
    %v598 = vpop.f32.mrb[0].mxu0
    %v599 = vpop.f32.mrb[0].mxu0
    %v600 = vpop.f32.mrb[0].mxu0
    %601 = vdwg.mxu0
    %v602 = vtanh.pop %v597
    %v603 = vpack.c.bf16 %v602, %v602
    %v604 = vld [vmem:[%s5] sm:$0xf]
    %v605 = vld [vmem:[%s5 + $0x4] sm:$0xf]
    %v606 = vld [vmem:[%s5 + $0x8] sm:$0xf]
    %v607 = vld [vmem:[%s5 + $0xc] sm:$0xf]
    %v608 = vld [vmem:[%s5 + $0x10] sm:$0xf]
    %v609 = vld [vmem:[%s5 + $0x14] sm:$0xf]
    %v610 = vld [vmem:[%s5 + $0x18] sm:$0xf]
    %v611 = vld [vmem:[%s5 + $0x1c] sm:$0xf]
    %v612 = vld [vmem:[%s5 + $0x20] sm:$0xf]
    %v613 = vld [vmem:[%s5 + $0x24] sm:$0xf]
    %v614 = vld [vmem:[%s5 + $0x28] sm:$0xf]
    %v615 = vld [vmem:[%s5 + $0x2c] sm:$0xf]
    %v616 = vld [vmem:[%s5 + $0x30] sm:$0xf]
    %v617 = vld [vmem:[%s5 + $0x34] sm:$0xf]
    %v618 = vld [vmem:[%s5 + $0x38] sm:$0xf]
    %v619 = vld [vmem:[%s5 + $0x3c] sm:$0xf]
    %v620 = vld [vmem:[%s6] sm:$0x1]
    %v622 = vlaneseq
    %v623 = vshrl.u32 %v622, 7
    %v624 = vsub.s32 0, %v623
    %v625 = vrot.slane %v620, %v624
    %v643 = vunpack.c.l.b16 %v604
    %v644 = vunpack.c.l.b16 %v605
    %v645 = vunpack.c.l.b16 %v606
    %v646 = vunpack.c.l.b16 %v607
    %v647 = vunpack.c.l.b16 %v608
    %v648 = vunpack.c.l.b16 %v609
    %v649 = vunpack.c.l.b16 %v610
    %v650 = vunpack.c.l.b16 %v611
    %v651 = vunpack.c.l.b16 %v612
    %v652 = vunpack.c.l.b16 %v613
    %v653 = vunpack.c.l.b16 %v614
    %v654 = vunpack.c.l.b16 %v615
    %v655 = vunpack.c.l.b16 %v616
    %v656 = vunpack.c.l.b16 %v617
    %v657 = vunpack.c.l.b16 %v618
    %v658 = vunpack.c.l.b16 %v619
    %v659 = vpack.c.b16 %v644, %v643
    %v660 = vpack.c.b16 %v646, %v645
    %v661 = vpack.c.b16 %v648, %v647
    %v662 = vpack.c.b16 %v650, %v649
    %v663 = vpack.c.b16 %v652, %v651
    %v664 = vpack.c.b16 %v654, %v653
    %v665 = vpack.c.b16 %v656, %v655
    %v666 = vpack.c.b16 %v658, %v657
    %675 = vmatprep.subr.bf16.mxu0 0
    %676 = vmatpush1.bf16.msra.mxu0 %v659
    %677 = vmatprep.subr.bf16.mxu0 0
    %678 = vmatpush1.bf16.msra.mxu0 %v660
    %679 = vmatprep.subr.bf16.mxu0 0
    %680 = vmatpush1.bf16.msra.mxu0 %v661
    %681 = vmatprep.subr.bf16.mxu0 0
    %682 = vmatpush1.bf16.msra.mxu0 %v662
    %683 = vmatprep.subr.bf16.mxu0 0
    %684 = vmatpush1.bf16.msra.mxu0 %v663
    %685 = vmatprep.subr.bf16.mxu0 0
    %686 = vmatpush1.bf16.msra.mxu0 %v664
    %687 = vmatprep.subr.bf16.mxu0 0
    %688 = vmatpush1.bf16.msra.mxu0 %v665
    %689 = vmatprep.subr.bf16.mxu0 0
    %690 = vmatpush1.bf16.msra.mxu0 %v666
    %691 = vmatprep.subr.bf16.mxu0 0
    %692 = vmatpush1.bf16.msra.mxu0 0
    %693 = vmatprep.subr.bf16.mxu0 0
    %694 = vmatpush1.bf16.msra.mxu0 0
    %695 = vmatprep.subr.bf16.mxu0 0
    %696 = vmatpush1.bf16.msra.mxu0 0
    %697 = vmatprep.subr.bf16.mxu0 0
    %698 = vmatpush1.bf16.msra.mxu0 0
    %699 = vmatprep.subr.bf16.mxu0 0
    %700 = vmatpush1.bf16.msra.mxu0 0
    %701 = vmatprep.subr.bf16.mxu0 0
    %702 = vmatpush1.bf16.msra.mxu0 0
    %703 = vmatprep.subr.bf16.mxu0 0
    %704 = vmatpush1.bf16.msra.mxu0 0
    %705 = vmatprep.subr.bf16.mxu0 0
    %706 = vmatpush1.bf16.msra.mxu0 0
    %707 = vmatprep.mubr.bf16.mxu0 0
    %708 = vmatmul.mubr.bf16.gmra.mrb[0].mxu0 %v603
    %v709 = vpop.f32.mrb[0].mxu0
    %v710 = vadd.f32 %v625, %v709
    %v711 = vpop.f32.mrb[0].mxu0
    %v712 = vpop.f32.mrb[0].mxu0
    %v713 = vpop.f32.mrb[0].mxu0
    %714 = vdwg.mxu0
    %715 = vst [vmem:[#allocation2] sm:$0xff] %v710
    // Predicated region
    $region30: #{ddml_forward.1} parent=1 // pred_check
      _
    $region31: #{ddml_forward.1} parent=1 // pred_check_branch
      %717 = sbr.rel (0) target = $region33
    $region32: #{ddml_forward.1} parent=1 // pred_region
      %s719 = ssub.s32 128, 128
      %720 = vsyncadd [#allocation3], %s719
      %s722 = sshll.u32 [#allocation2], 4
      %s723 = int_to_ptr.vmem [resolvable:$true] %s722
      %725 = dma.vmem_to_hbm [thread:$0]  %s723, 128, %s7, [#allocation3]
    $region33: #{ddml_forward.1} parent=1 // pred_fallthru
      _
    // Predicated region
    $region34: #{ddml_forward.1} parent=1 // pred_check
      _
    $region35: #{ddml_forward.1} parent=1 // pred_check_branch
      %727 = sbr.rel (0) target = $region37
    $region36: #{ddml_forward.1} parent=1 // pred_region
      %728 = dma.done [#allocation3], 128
    $region37: #{ddml_forward.1} parent=1 // pred_fallthru
      _
    %729 = vsyncpa [#allocation3], 1

</llo_original>
